<compile_context>
chip_gen: v5e
topology: v5e:2x2
jax: 0.10.0
libtpu: 0.0.40
codegen_flags: <defaults>
</compile_context>

<pallas_src>
from functools import partial

import numpy as np
import jax
import jax.numpy as jnp
from jax.experimental import pallas as pl
from jax.experimental.pallas import tpu as pltpu

D_IN, H1, H2, D_OUT = 110, 192, 256, 270
LEAKY_SLOPE = 0.01


# ----------------------------- helpers --------------------------------------
def _stable_sigmoid(q):
    """Overflow-safe sigmoid; exp goes to the (otherwise idle) EUP slot."""
    e = jnp.exp(-jnp.abs(q))
    p = 1.0 / (1.0 + e)                      # sigmoid(|q|)
    return jnp.where(q >= 0, p, 1.0 - p)


def _pick_bblk(B, ct_n):
    """Batch block so M = Bblk*ct_n ~ 256 rows (one v6e/v7x MXU pass, two on
    v5e) without padding tiny batches up to a full block."""
    target = max(8, 256 // max(int(ct_n), 1))
    bblk = min(target, max(int(B), 1))
    return int(-(-bblk // 8) * 8)            # round up to a sublane multiple


def _dim_semantics(grid_size):
    """CORE_PARALLEL splits the batch-block axis across v7x's two TensorCores;
    plain "parallel" elsewhere (single-TC v5e/v6e)."""
    try:
        kind = jax.devices()[0].device_kind.lower()
    except Exception:
        kind = ""
    if "v7" in kind and grid_size % 2 == 0:
        return (pltpu.CORE_PARALLEL,)
    return ("parallel",)


# ----------------------------- Pallas kernel -------------------------------
def _q_mlp_kernel(ct_ref, z_ref, w1c_ref, w1zb_ref, w2_ref, b2_ref, w3s_ref,
                  b3_ref, o_ref, *, bblk, ct_n, ct_dim):
    """One batch-block per grid step; everything resident in VMEM.

    Point-major flattening: matmul row (p, b) -> p*bblk + b, so each sample's
    ct_n rows are NOT interleaved; the grouped reduction over points is a
    contiguous leading-dim sum and all reshapes are layout-trivial
    (bblk % 8 == 0)."""
    wdt = w2_ref.dtype

    ct = ct_ref[...].reshape(ct_n * bblk, ct_dim)          # (M, ct_dim)
    z = z_ref[...]                                          # (bblk, z_len + 1)

    # Layer 1 with concat/tile and bias fused away (split contraction; b1
    # rides as the last row of w1zb against z's trailing ones column).
    h1z = jnp.dot(z, w1zb_ref[...], preferred_element_type=jnp.float32)    # (bblk, H1)
    h1 = (jnp.dot(ct, w1c_ref[...], preferred_element_type=jnp.float32)
          + jnp.tile(h1z, (ct_n, 1)))                                      # (M, H1)
    h1 = jnp.maximum(h1, LEAKY_SLOPE * h1)                  # LeakyReLU(0.01)

    h2 = (jnp.dot(h1.astype(wdt), w2_ref[...], preferred_element_type=jnp.float32)
          + b2_ref[...])
    h2 = jnp.maximum(h2, LEAKY_SLOPE * h2)                  # (M, H2)

    # mean(h2 @ w3 + b3) over ct_n  ==  sum(h2) @ (w3/ct_n) + b3
    s = jnp.sum(h2.reshape(ct_n, bblk, H2), axis=0)         # (bblk, H2)

    q = (jnp.dot(s.astype(wdt), w3s_ref[...], preferred_element_type=jnp.float32)
         + b3_ref[...])                                     # (bblk, D_OUT)
    o_ref[...] = _stable_sigmoid(q)                         # lane-dense store


def _pallas_q_mlp(ct_pm, z_aug, w1c, w1zb, w2, b2, w3s, b3, *, bblk):
    """ct_pm: (ct_n, Bpad, ct_dim) point-major, z_aug: (Bpad, z_len+1)
       -> (Bpad, 270)."""
    ct_n, bpad, ct_dim = ct_pm.shape
    z_dim = z_aug.shape[-1]
    grid = (bpad // bblk,)
    const2 = lambda b: (0, 0)                # weights stay VMEM-resident
    kernel = partial(_q_mlp_kernel, bblk=bblk, ct_n=ct_n, ct_dim=ct_dim)
    return pl.pallas_call(
        kernel,
        out_shape=jax.ShapeDtypeStruct((bpad, D_OUT), jnp.float32),
        grid=grid,
        in_specs=[
            pl.BlockSpec((ct_n, bblk, ct_dim), lambda b: (0, b, 0)),
            pl.BlockSpec((bblk, z_dim), lambda b: (b, 0)),
            pl.BlockSpec((ct_dim, H1), const2),
            pl.BlockSpec((z_dim, H1), const2),
            pl.BlockSpec((H1, H2), const2),
            pl.BlockSpec((1, H2), const2),
            pl.BlockSpec((H2, D_OUT), const2),
            pl.BlockSpec((1, D_OUT), const2),
        ],
        out_specs=pl.BlockSpec((bblk, D_OUT), lambda b: (b, 0)),
        compiler_params=pltpu.CompilerParams(
            dimension_semantics=_dim_semantics(grid[0])),
    )(ct_pm, z_aug, w1c, w1zb, w2, b2, w3s, b3)


# ----------------------------- parameters ----------------------------------
def init_params(key):
    """Deterministic init mimicking nn.Linear default U(-1/sqrt(fan_in), +)."""
    dims = [(D_IN, H1), (H1, H2), (H2, D_OUT)]
    params = []
    for fan_in, fan_out in dims:
        key, kw, kb = jax.random.split(key, 3)
        bound = 1.0 / np.sqrt(fan_in)
        w = jax.random.uniform(kw, (fan_in, fan_out), jnp.float32, -bound, bound)
        b = jax.random.uniform(kb, (1, fan_out), jnp.float32, -bound, bound)
        params += [w, b]
    return tuple(params)


# ----------------------------- jitted apply --------------------------------
@partial(jax.jit, static_argnames=("compute_dtype",))
def q_predictor_apply(ct, z, params, compute_dtype=jnp.float32):
    """Batched forward.  ct: (B, ct_n, ct_dim), z: (B, z_len) -> (B, 270, 1)."""
    w1, b1, w2, b2, w3, b3 = params
    B, ct_n, ct_dim = ct.shape
    z_len = z.shape[-1]
    assert ct_dim + z_len == D_IN, "Linear(110, ...) expects ct_dim + z_len == 110"

    cdt = jnp.dtype(compute_dtype)

    # Fold b1 into the z path; fold the 1/ct_n mean scale into w3.
    w1c = w1[:ct_dim].astype(cdt)                                   # (ct_dim, 192)
    w1zb = jnp.concatenate([w1[ct_dim:], b1], axis=0).astype(cdt)   # (z_len+1, 192)
    w2c = w2.astype(cdt)
    w3s = (w3 * (1.0 / ct_n)).astype(cdt)
    b2f = b2.astype(jnp.float32)
    b3f = b3.astype(jnp.float32)

    z_aug = jnp.concatenate([z, jnp.ones((B, 1), z.dtype)], axis=-1).astype(cdt)
    ct_c = ct.astype(cdt)

    # Batch blocking + padding of the remainder (padded rows are independent
    # garbage and are sliced off after the call).
    bblk = _pick_bblk(B, ct_n)
    bpad = int(-(-B // bblk)) * bblk
    pad = bpad - B
    if pad:
        ct_c = jnp.concatenate([ct_c, jnp.zeros((pad, ct_n, ct_dim), cdt)], axis=0)
        z_aug = jnp.concatenate([z_aug, jnp.zeros((pad, z_len + 1), cdt)], axis=0)

    ct_pm = jnp.swapaxes(ct_c, 0, 1)                     # (ct_n, Bpad, ct_dim)

    q = _pallas_q_mlp(ct_pm, z_aug, w1c, w1zb, w2c, b2f, w3s, b3f, bblk=bblk)
    return q[:B].reshape(B, D_OUT, 1)


# ----------------------------- wrapper (glue) -------------------------------
def q_predictor_forward(x_flat, params, compute_dtype=jnp.float32):
    """Replicates Q_predictor.forward for one flat input vector.
    Only the 4-scalar shape tail is pulled to host (torch does int(ct_shape));
    the state stays device-resident and is sliced with static sizes."""
    x = jnp.asarray(x_flat, jnp.float32).reshape(-1)
    ct_n, ct_dim, tgt_n, tgt_dim = (int(v) for v in np.asarray(jax.device_get(x[-4:])))
    state = x[:-4]
    n_ct, n_tgt = ct_n * ct_dim, tgt_n * tgt_dim
    z_len = int(state.shape[0]) - n_ct - n_tgt
    ct = state[:n_ct].reshape(1, ct_n, ct_dim)
    z = state[n_ct + n_tgt:].reshape(1, z_len)
    # t_pts (target points) is built by the torch module but never used in forward.
    return q_predictor_apply(ct, z, params, compute_dtype=compute_dtype)[0]   # (270, 1)


# ----------------------------- reference ------------------------------------
def _reference_apply_single(ct, z, params):
    """Pure-JAX reference with the ORIGINAL op order (concat+tile, mean last)."""
    w1, b1, w2, b2, w3, b3 = params
    ct_n = ct.shape[0]
    inp = jnp.concatenate([ct, jnp.tile(z.reshape(1, -1), (ct_n, 1))], axis=1)
    h = jnp.dot(inp, w1) + b1
    h = jnp.where(h > 0, h, LEAKY_SLOPE * h)
    h = jnp.dot(h, w2) + b2
    h = jnp.where(h > 0, h, LEAKY_SLOPE * h)
    h = jnp.dot(h, w3) + b3
    q = jnp.mean(h, axis=0, keepdims=True)
    return (1.0 / (1.0 + jnp.exp(-q))).reshape(-1, 1)


_reference_apply_batch = jax.jit(jax.vmap(_reference_apply_single,
                                          in_axes=(0, 0, None)))


# ----------------------------- main -----------------------------------------
if __name__ == "__main__":
    key = jax.random.PRNGKey(0)
    key, kp, kx, kb, kz = jax.random.split(key, 5)
    params = init_params(kp)

    # ct_n=4 control points of dim 6, tgt_n=3 targets of dim 2, z_len=104
    # (ct_dim + z_len = 110 matches Linear(110, 192)).
    ct_n, ct_dim = 4, 6
    tgt_n, tgt_dim = 3, 2
    z_len = D_IN - ct_dim
    n_state = ct_n * ct_dim + tgt_n * tgt_dim + z_len

    # ---- single flat-vector path (module-equivalent interface) ----
    state = jax.random.normal(kx, (n_state,), jnp.float32)
    tail = jnp.asarray([ct_n, ct_dim, tgt_n, tgt_dim], dtype=jnp.float32)
    x = jnp.concatenate([state, tail])                   # flat input, like the module
    out = jax.block_until_ready(q_predictor_forward(x, params))
    assert out.shape == (D_OUT, 1), out.shape

    ct_single = state[:ct_n * ct_dim].reshape(ct_n, ct_dim)
    z_single = state[ct_n * ct_dim + tgt_n * tgt_dim:]
    ref = _reference_apply_single(ct_single, z_single, params)
    np.testing.assert_allclose(np.asarray(out), np.asarray(ref),
                               rtol=1e-3, atol=1e-4)

    # ---- batched path: blocked grid (Bblk samples/step), padded remainder ----
    B = 100                                              # not a multiple of Bblk=64
    ct_b = jax.random.normal(kb, (B, ct_n, ct_dim), jnp.float32)
    z_b = jax.random.normal(kz, (B, z_len), jnp.float32)
    out_b = jax.block_until_ready(q_predictor_apply(ct_b, z_b, params))
    assert out_b.shape == (B, D_OUT, 1), out_b.shape
    ref_b = _reference_apply_batch(ct_b, z_b, params)
    np.testing.assert_allclose(np.asarray(out_b), np.asarray(ref_b),
                               rtol=1e-3, atol=1e-4)

    # ---- bf16 weights/activations, f32 accumulation (v5e/v6e/v7x MXU) ----
    out_bf16 = jax.block_until_ready(
        q_predictor_apply(ct_b, z_b, params, compute_dtype=jnp.bfloat16))
    np.testing.assert_allclose(np.asarray(out_bf16), np.asarray(ref_b),
                               rtol=5e-2, atol=2e-2)

    print("KERNEL_OK")
</pallas_src>

<mosaic_0001>
module attributes {stable_mosaic.version = 11 : i64} {
  func.func @_q_mlp_kernel(%arg0: i32, %arg1: memref<4x8x6xf32, #tpu.memory_space<vmem>>, %arg2: memref<8x105xf32, #tpu.memory_space<vmem>>, %arg3: memref<6x192xf32, #tpu.memory_space<vmem>>, %arg4: memref<105x192xf32, #tpu.memory_space<vmem>>, %arg5: memref<192x256xf32, #tpu.memory_space<vmem>>, %arg6: memref<1x256xf32, #tpu.memory_space<vmem>>, %arg7: memref<256x270xf32, #tpu.memory_space<vmem>>, %arg8: memref<1x270xf32, #tpu.memory_space<vmem>>, %arg9: memref<8x270xf32, #tpu.memory_space<vmem>>) attributes {dimension_semantics = [#tpu.dimension_semantics<parallel>], iteration_bounds = array<i64: 1>, scalar_prefetch = 0 : i64, scratch_operands = 0 : i64, tpu.core_type = #tpu.core_type<tc>, window_params = [{transform_indices = @transform_0, window_bounds = array<i64: 4, 8, 6>}, {transform_indices = @transform_1, window_bounds = array<i64: 8, 105>}, {pipeline_mode = #tpu.pipeline_mode<synchronous>, transform_indices = @transform_2, window_bounds = array<i64: 6, 192>}, {pipeline_mode = #tpu.pipeline_mode<synchronous>, transform_indices = @transform_3, window_bounds = array<i64: 105, 192>}, {pipeline_mode = #tpu.pipeline_mode<synchronous>, transform_indices = @transform_4, window_bounds = array<i64: 192, 256>}, {pipeline_mode = #tpu.pipeline_mode<synchronous>, transform_indices = @transform_5, window_bounds = array<i64: 1, 256>}, {pipeline_mode = #tpu.pipeline_mode<synchronous>, transform_indices = @transform_6, window_bounds = array<i64: 256, 270>}, {pipeline_mode = #tpu.pipeline_mode<synchronous>, transform_indices = @transform_7, window_bounds = array<i64: 1, 270>}, {transform_indices = @transform_8, window_bounds = array<i64: 8, 270>}]} {
    %c0 = arith.constant 0 : index
    %c0_0 = arith.constant 0 : index
    %c0_1 = arith.constant 0 : index
    %0 = vector.load %arg1[%c0, %c0_0, %c0_1] : memref<4x8x6xf32, #tpu.memory_space<vmem>>, vector<4x8x6xf32>
    %1 = vector.shape_cast %0 : vector<4x8x6xf32> to vector<32x6xf32>
    %c0_2 = arith.constant 0 : index
    %c0_3 = arith.constant 0 : index
    %2 = vector.load %arg2[%c0_2, %c0_3] : memref<8x105xf32, #tpu.memory_space<vmem>>, vector<8x105xf32>
    %c0_4 = arith.constant 0 : index
    %c0_5 = arith.constant 0 : index
    %3 = vector.load %arg4[%c0_4, %c0_5] : memref<105x192xf32, #tpu.memory_space<vmem>>, vector<105x192xf32>
    %cst = arith.constant dense<0.000000e+00> : vector<8x192xf32>
    %4 = tpu.matmul %2, %3, %cst {dimension_numbers = #tpu.dot_dimension_numbers<[1], [0], [0], [1], [0, 0, 1, 1], [], []>} : vector<8x105xf32>, vector<105x192xf32>, vector<8x192xf32> -> vector<8x192xf32>
    %c0_6 = arith.constant 0 : index
    %c0_7 = arith.constant 0 : index
    %5 = vector.load %arg3[%c0_6, %c0_7] : memref<6x192xf32, #tpu.memory_space<vmem>>, vector<6x192xf32>
    %cst_8 = arith.constant dense<0.000000e+00> : vector<32x192xf32>
    %6 = tpu.matmul %1, %5, %cst_8 {dimension_numbers = #tpu.dot_dimension_numbers<[1], [0], [0], [1], [0, 0, 1, 1], [], []>} : vector<32x6xf32>, vector<6x192xf32>, vector<32x192xf32> -> vector<32x192xf32>
    %7 = tpu.concatenate %4, %4, %4, %4 in 0 : vector<8x192xf32>, vector<8x192xf32>, vector<8x192xf32>, vector<8x192xf32> -> vector<32x192xf32>
    %8 = arith.addf %6, %7 : vector<32x192xf32>
    %cst_9 = arith.constant 0.00999999977 : f32
    %9 = vector.broadcast %cst_9 : f32 to vector<32x192xf32>
    %10 = arith.mulf %9, %8 : vector<32x192xf32>
    %11 = arith.maximumf %8, %10 : vector<32x192xf32>
    %c0_10 = arith.constant 0 : index
    %c0_11 = arith.constant 0 : index
    %12 = vector.load %arg5[%c0_10, %c0_11] : memref<192x256xf32, #tpu.memory_space<vmem>>, vector<192x256xf32>
    %cst_12 = arith.constant dense<0.000000e+00> : vector<32x256xf32>
    %13 = tpu.matmul %11, %12, %cst_12 {dimension_numbers = #tpu.dot_dimension_numbers<[1], [0], [0], [1], [0, 0, 1, 1], [], []>} : vector<32x192xf32>, vector<192x256xf32>, vector<32x256xf32> -> vector<32x256xf32>
    %c0_13 = arith.constant 0 : index
    %c0_14 = arith.constant 0 : index
    %14 = vector.load %arg6[%c0_13, %c0_14] : memref<1x256xf32, #tpu.memory_space<vmem>>, vector<1x256xf32>
    %15 = vector.broadcast %14 : vector<1x256xf32> to vector<32x256xf32>
    %16 = arith.addf %13, %15 : vector<32x256xf32>
    %cst_15 = arith.constant 0.00999999977 : f32
    %17 = vector.broadcast %cst_15 : f32 to vector<32x256xf32>
    %18 = arith.mulf %17, %16 : vector<32x256xf32>
    %19 = arith.maximumf %16, %18 : vector<32x256xf32>
    %20 = vector.shape_cast %19 : vector<32x256xf32> to vector<4x8x256xf32>
    %cst_16 = arith.constant dense<0.000000e+00> : vector<8x256xf32>
    %21 = vector.multi_reduction <add>, %20, %cst_16 [0] : vector<4x8x256xf32> to vector<8x256xf32>
    %c0_17 = arith.constant 0 : index
    %c0_18 = arith.constant 0 : index
    %22 = vector.load %arg7[%c0_17, %c0_18] : memref<256x270xf32, #tpu.memory_space<vmem>>, vector<256x270xf32>
    %cst_19 = arith.constant dense<0.000000e+00> : vector<8x270xf32>
    %23 = tpu.matmul %21, %22, %cst_19 {dimension_numbers = #tpu.dot_dimension_numbers<[1], [0], [0], [1], [0, 0, 1, 1], [], []>} : vector<8x256xf32>, vector<256x270xf32>, vector<8x270xf32> -> vector<8x270xf32>
    %c0_20 = arith.constant 0 : index
    %c0_21 = arith.constant 0 : index
    %24 = vector.load %arg8[%c0_20, %c0_21] : memref<1x270xf32, #tpu.memory_space<vmem>>, vector<1x270xf32>
    %25 = vector.broadcast %24 : vector<1x270xf32> to vector<8x270xf32>
    %26 = arith.addf %23, %25 : vector<8x270xf32>
    %27 = math.absf %26 : vector<8x270xf32>
    %cst_22 = arith.constant 0.000000e+00 : f32
    %28 = vector.broadcast %cst_22 : f32 to vector<8x270xf32>
    %29 = arith.subf %28, %27 : vector<8x270xf32>
    %30 = math.exp %29 : vector<8x270xf32>
    %cst_23 = arith.constant 1.000000e+00 : f32
    %31 = vector.broadcast %cst_23 : f32 to vector<8x270xf32>
    %32 = arith.addf %31, %30 : vector<8x270xf32>
    %cst_24 = arith.constant 1.000000e+00 : f32
    %33 = vector.broadcast %cst_24 : f32 to vector<8x270xf32>
    %34 = arith.divf %33, %32 : vector<8x270xf32>
    %cst_25 = arith.constant 0.000000e+00 : f32
    %35 = vector.broadcast %cst_25 : f32 to vector<8x270xf32>
    %36 = arith.cmpf oge, %26, %35 : vector<8x270xf32>
    %cst_26 = arith.constant 1.000000e+00 : f32
    %37 = vector.broadcast %cst_26 : f32 to vector<8x270xf32>
    %38 = arith.subf %37, %34 : vector<8x270xf32>
    %39 = arith.select %36, %34, %38 : vector<8x270xi1>, vector<8x270xf32>
    %c0_27 = arith.constant 0 : index
    %c0_28 = arith.constant 0 : index
    %40 = vector.load %arg9[%c0_27, %c0_28] : memref<8x270xf32, #tpu.memory_space<vmem>>, vector<8x270xf32>
    tpu.vector_store %arg9[%c0_27, %c0_28], %39 {strides = array<i32>} : memref<8x270xf32, #tpu.memory_space<vmem>>, vector<8x270xf32>,
    return
  }
  func.func @transform_0(%arg0: i32) -> (i32, i32, i32) {
    %c0_i32 = arith.constant 0 : i32
    %c0_i32_0 = arith.constant 0 : i32
    %c0_i32_1 = arith.constant 0 : i32
    return %c0_i32, %arg0, %c0_i32_0 : i32, i32, i32
  }
  func.func @transform_1(%arg0: i32) -> (i32, i32) {
    %c0_i32 = arith.constant 0 : i32
    %c0_i32_0 = arith.constant 0 : i32
    return %arg0, %c0_i32 : i32, i32
  }
  func.func @transform_2(%arg0: i32) -> (i32, i32) {
    %c0_i32 = arith.constant 0 : i32
    %c0_i32_0 = arith.constant 0 : i32
    %c0_i32_1 = arith.constant 0 : i32
    return %c0_i32, %c0_i32_0 : i32, i32
  }
  func.func @transform_3(%arg0: i32) -> (i32, i32) {
    %c0_i32 = arith.constant 0 : i32
    %c0_i32_0 = arith.constant 0 : i32
    %c0_i32_1 = arith.constant 0 : i32
    return %c0_i32, %c0_i32_0 : i32, i32
  }
  func.func @transform_4(%arg0: i32) -> (i32, i32) {
    %c0_i32 = arith.constant 0 : i32
    %c0_i32_0 = arith.constant 0 : i32
    %c0_i32_1 = arith.constant 0 : i32
    return %c0_i32, %c0_i32_0 : i32, i32
  }
  func.func @transform_5(%arg0: i32) -> (i32, i32) {
    %c0_i32 = arith.constant 0 : i32
    %c0_i32_0 = arith.constant 0 : i32
    %c0_i32_1 = arith.constant 0 : i32
    return %c0_i32, %c0_i32_0 : i32, i32
  }
  func.func @transform_6(%arg0: i32) -> (i32, i32) {
    %c0_i32 = arith.constant 0 : i32
    %c0_i32_0 = arith.constant 0 : i32
    %c0_i32_1 = arith.constant 0 : i32
    return %c0_i32, %c0_i32_0 : i32, i32
  }
  func.func @transform_7(%arg0: i32) -> (i32, i32) {
    %c0_i32 = arith.constant 0 : i32
    %c0_i32_0 = arith.constant 0 : i32
    %c0_i32_1 = arith.constant 0 : i32
    return %c0_i32, %c0_i32_0 : i32, i32
  }
  func.func @transform_8(%arg0: i32) -> (i32, i32) {
    %c0_i32 = arith.constant 0 : i32
    %c0_i32_0 = arith.constant 0 : i32
    return %arg0, %c0_i32 : i32, i32
  }
}

</mosaic_0001>

<llo_original>
// kernel: q_predictor_apply.1
$region0: #{q_predictor_apply.1}
  #allocation0 [shape = 'u32[]', space=smem, size = 0x4, offset = 0x4, fixed_abs, tag = 'smem constant byte address 0x4 - core index']
  #allocation1 [shape = 'u32[72,128]{1,0:T(1,128)}', space=vmem, size = 0x9000, scoped, tag = 'internal scratch']
  %s0 = inlined_call_operand.vmem [shape: f32[4,8,6], index: 0, kind: input, shape index: {}]
  %s1 = inlined_call_operand.vmem [shape: f32[8,105], index: 1, kind: input, shape index: {}]
  %s2 = inlined_call_operand.vmem [shape: f32[6,192], index: 2, kind: input, shape index: {}]
  %s3 = inlined_call_operand.vmem [shape: f32[105,192], index: 3, kind: input, shape index: {}]
  %s4 = inlined_call_operand.vmem [shape: f32[192,256], index: 4, kind: input, shape index: {}]
  %s5 = inlined_call_operand.vmem [shape: f32[1,256], index: 5, kind: input, shape index: {}]
  %s6 = inlined_call_operand.vmem [shape: f32[256,270], index: 6, kind: input, shape index: {}]
  %s7 = inlined_call_operand.vmem [shape: f32[1,270], index: 7, kind: input, shape index: {}]
  %s8 = inlined_call_operand.vmem [shape: f32[8,270], index: 8, kind: output, shape index: {}]
  %s9 = sld [smem:[#allocation0]]
  $region42: #{q_predictor_apply.1} parent=0
    _
  %s11 = ssub.s32 1, %s9
  %s12 = scalar_select 0, %s11, %s9
  // Predicated region
  $region2: #{q_predictor_apply.1} parent=0 // pred_check
    _
  $region3: #{q_predictor_apply.1} parent=0 // pred_check_branch
    %14 = sbr.rel (0) target = $region5
  $region4: #{q_predictor_apply.1} parent=0 // pred_region
    _
  $region5: #{q_predictor_apply.1} parent=0 // pred_fallthru
    _
  // Predicated region
  $region6: #{q_predictor_apply.1} parent=0 // pred_check
    _
  $region7: #{q_predictor_apply.1} parent=0 // pred_check_branch
    %16 = sbr.rel (0) target = $region9
  $region8: #{q_predictor_apply.1} parent=0 // pred_region
    _
  $region9: #{q_predictor_apply.1} parent=0 // pred_fallthru
    _
  // Predicated region
  $region10: #{q_predictor_apply.1} parent=0 // pred_check
    _
  $region11: #{q_predictor_apply.1} parent=0 // pred_check_branch
    %18 = sbr.rel (0) target = $region13
  $region12: #{q_predictor_apply.1} parent=0 // pred_region
    _
  $region13: #{q_predictor_apply.1} parent=0 // pred_fallthru
    _
  // Predicated region
  $region14: #{q_predictor_apply.1} parent=0 // pred_check
    _
  $region15: #{q_predictor_apply.1} parent=0 // pred_check_branch
    %20 = sbr.rel (0) target = $region17
  $region16: #{q_predictor_apply.1} parent=0 // pred_region
    _
  $region17: #{q_predictor_apply.1} parent=0 // pred_fallthru
    _
  // Predicated region
  $region18: #{q_predictor_apply.1} parent=0 // pred_check
    _
  $region19: #{q_predictor_apply.1} parent=0 // pred_check_branch
    %22 = sbr.rel (0) target = $region21
  $region20: #{q_predictor_apply.1} parent=0 // pred_region
    _
  $region21: #{q_predictor_apply.1} parent=0 // pred_fallthru
    _
  // Predicated region
  $region22: #{q_predictor_apply.1} parent=0 // pred_check
    _
  $region23: #{q_predictor_apply.1} parent=0 // pred_check_branch
    %24 = sbr.rel (0) target = $region25
  $region24: #{q_predictor_apply.1} parent=0 // pred_region
    _
  $region25: #{q_predictor_apply.1} parent=0 // pred_fallthru
    _
  // Predicated region
  $region26: #{q_predictor_apply.1} parent=0 // pred_check
    _
  $region27: #{q_predictor_apply.1} parent=0 // pred_check_branch
    %26 = sbr.rel (0) target = $region29
  $region28: #{q_predictor_apply.1} parent=0 // pred_region
    _
  $region29: #{q_predictor_apply.1} parent=0 // pred_fallthru
    _
  // Predicated region
  $region30: #{q_predictor_apply.1} parent=0 // pred_check
    _
  $region31: #{q_predictor_apply.1} parent=0 // pred_check_branch
    %28 = sbr.rel (0) target = $region33
  $region32: #{q_predictor_apply.1} parent=0 // pred_region
    _
  $region33: #{q_predictor_apply.1} parent=0 // pred_fallthru
    _
  %v29 = vld [vmem:[%s0] sm:$0xff]
  %v30 = vld [vmem:[%s0 + $0x8] sm:$0xff]
  %v31 = vld [vmem:[%s0 + $0x10] sm:$0xff]
  %v32 = vld [vmem:[%s0 + $0x18] sm:$0xff]
  %v33 = vld [vmem:[%s1] sm:$0xff]
  %v34 = vld [vmem:[%s3] sm:$0xff]
  %v35 = vld [vmem:[%s3 + $0x8] sm:$0xff]
  %v36 = vld [vmem:[%s3 + $0x10] sm:$0xff]
  %v37 = vld [vmem:[%s3 + $0x18] sm:$0xff]
  %v38 = vld [vmem:[%s3 + $0x20] sm:$0xff]
  %v39 = vld [vmem:[%s3 + $0x28] sm:$0xff]
  %v40 = vld [vmem:[%s3 + $0x30] sm:$0xff]
  %v41 = vld [vmem:[%s3 + $0x38] sm:$0xff]
  %v42 = vld [vmem:[%s3 + $0x40] sm:$0xff]
  %v43 = vld [vmem:[%s3 + $0x48] sm:$0xff]
  %v44 = vld [vmem:[%s3 + $0x50] sm:$0xff]
  %v45 = vld [vmem:[%s3 + $0x58] sm:$0xff]
  %v46 = vld [vmem:[%s3 + $0x60] sm:$0xff]
  %v47 = vld [vmem:[%s3 + $0x68] sm:$0xff]
  %v48 = vld [vmem:[%s3 + $0x70] sm:$0xff]
  %v49 = vld [vmem:[%s3 + $0x78] sm:$0xff]
  %v50 = vld [vmem:[%s3 + $0x80] sm:$0xff]
  %v51 = vld [vmem:[%s3 + $0x88] sm:$0xff]
  %v52 = vld [vmem:[%s3 + $0x90] sm:$0xff]
  %v53 = vld [vmem:[%s3 + $0x98] sm:$0xff]
  %v54 = vld [vmem:[%s3 + $0xa0] sm:$0xff]
  %v55 = vld [vmem:[%s3 + $0xa8] sm:$0xff]
  %v56 = vld [vmem:[%s3 + $0xb0] sm:$0xff]
  %v57 = vld [vmem:[%s3 + $0xb8] sm:$0xff]
  %v58 = vld [vmem:[%s3 + $0xc0] sm:$0xff]
  %v59 = vld [vmem:[%s3 + $0xc8] sm:$0xff]
  %v60 = vld [vmem:[%s3 + $0xd0] sm:$0x1]
  %v61 = vld [vmem:[%s3 + $0xd8] sm:$0x1]
  %vm62 = vcmask 859136
  %v64 = vsel %vm62, %v33, 0
  %vm66 = vcmask 1040384
  %v68 = vsel %vm66, %v60, 0
  %v71 = vsel %vm66, %v61, 0
  %73 = vmatpush.msra.mxu0 0.0
  %74 = vmatpush.msra.mxu0 0.0
  %75 = vmatpush.msra.mxu0 %v68
  %76 = vmatpush.msra.mxu0 %v58
  %77 = vmatpush.msra.mxu0 %v56
  %78 = vmatpush.msra.mxu0 %v54
  %79 = vmatpush.msra.mxu0 %v52
  %80 = vmatpush.msra.mxu0 %v50
  %81 = vmatpush.msra.mxu0 %v48
  %82 = vmatpush.msra.mxu0 %v46
  %83 = vmatpush.msra.mxu0 %v44
  %84 = vmatpush.msra.mxu0 %v42
  %85 = vmatpush.msra.mxu0 %v40
  %86 = vmatpush.msra.mxu0 %v38
  %87 = vmatpush.msra.mxu0 %v36
  %88 = vmatpush.msra.mxu0 %v34
  %89 = vmatmul.f32.gmra.mxu0 %v64
  %v90 = vpop.f32.mrf.mxu0
  %v91 = vadd.f32 0.0, %v90
  %92 = vdwg.mxu0
  %93 = vmatpush.msra.mxu0 0.0
  %94 = vmatpush.msra.mxu0 0.0
  %95 = vmatpush.msra.mxu0 %v71
  %96 = vmatpush.msra.mxu0 %v59
  %97 = vmatpush.msra.mxu0 %v57
  %98 = vmatpush.msra.mxu0 %v55
  %99 = vmatpush.msra.mxu0 %v53
  %100 = vmatpush.msra.mxu0 %v51
  %101 = vmatpush.msra.mxu0 %v49
  %102 = vmatpush.msra.mxu0 %v47
  %103 = vmatpush.msra.mxu0 %v45
  %104 = vmatpush.msra.mxu0 %v43
  %105 = vmatpush.msra.mxu0 %v41
  %106 = vmatpush.msra.mxu0 %v39
  %107 = vmatpush.msra.mxu0 %v37
  %108 = vmatpush.msra.mxu0 %v35
  %109 = vmatmul.f32.gmra.mxu0 %v64
  %v110 = vpop.f32.mrf.mxu0
  %v111 = vadd.f32 0.0, %v110
  %112 = vdwg.mxu0
  %v113 = vld [vmem:[%s2] sm:$0x3f]
  %v114 = vld [vmem:[%s2 + $0x8] sm:$0x3f]
  %vm115 = vcmask 48128
  %v117 = vsel %vm115, %v29, 0
  %v120 = vsel %vm115, %v30, 0
  %v123 = vsel %vm115, %v31, 0
  %v126 = vsel %vm115, %v32, 0
  %vm128 = vcmask 1045504
  %v130 = vsel %vm128, %v113, 0
  %v133 = vsel %vm128, %v114, 0
  %135 = vmatpush.msra.mxu0 0.0
  %136 = vmatpush.msra.mxu0 0.0
  %137 = vmatpush.msra.mxu0 0.0
  %138 = vmatpush.msra.mxu0 0.0
  %139 = vmatpush.msra.mxu0 0.0
  %140 = vmatpush.msra.mxu0 0.0
  %141 = vmatpush.msra.mxu0 0.0
  %142 = vmatpush.msra.mxu0 0.0
  %143 = vmatpush.msra.mxu0 0.0
  %144 = vmatpush.msra.mxu0 0.0
  %145 = vmatpush.msra.mxu0 0.0
  %146 = vmatpush.msra.mxu0 0.0
  %147 = vmatpush.msra.mxu0 0.0
  %148 = vmatpush.msra.mxu0 0.0
  %149 = vmatpush.msra.mxu0 0.0
  %150 = vmatpush.msra.mxu0 %v130
  %151 = vmatmul.f32.gmra.mxu0 %v117
  %v152 = vpop.f32.mrf.mxu0
  %v153 = vadd.f32 %v91, %v152
  %154 = vmatmul.f32.gmra.mxu0 %v120
  %v155 = vpop.f32.mrf.mxu0
  %v156 = vadd.f32 %v91, %v155
  %157 = vmatmul.f32.gmra.mxu0 %v123
  %v158 = vpop.f32.mrf.mxu0
  %v159 = vadd.f32 %v91, %v158
  %160 = vmatmul.f32.gmra.mxu0 %v126
  %v161 = vpop.f32.mrf.mxu0
  %v162 = vadd.f32 %v91, %v161
  %163 = vdwg.mxu0
  %164 = vmatpush.msra.mxu0 0.0
  %165 = vmatpush.msra.mxu0 0.0
  %166 = vmatpush.msra.mxu0 0.0
  %167 = vmatpush.msra.mxu0 0.0
  %168 = vmatpush.msra.mxu0 0.0
  %169 = vmatpush.msra.mxu0 0.0
  %170 = vmatpush.msra.mxu0 0.0
  %171 = vmatpush.msra.mxu0 0.0
  %172 = vmatpush.msra.mxu0 0.0
  %173 = vmatpush.msra.mxu0 0.0
  %174 = vmatpush.msra.mxu0 0.0
  %175 = vmatpush.msra.mxu0 0.0
  %176 = vmatpush.msra.mxu0 0.0
  %177 = vmatpush.msra.mxu0 0.0
  %178 = vmatpush.msra.mxu0 0.0
  %179 = vmatpush.msra.mxu0 %v133
  %180 = vmatmul.f32.gmra.mxu0 %v117
  %v181 = vpop.f32.mrf.mxu0
  %v182 = vadd.f32 %v111, %v181
  %183 = vmatmul.f32.gmra.mxu0 %v120
  %v184 = vpop.f32.mrf.mxu0
  %v185 = vadd.f32 %v111, %v184
  %186 = vmatmul.f32.gmra.mxu0 %v123
  %v187 = vpop.f32.mrf.mxu0
  %v188 = vadd.f32 %v111, %v187
  %189 = vmatmul.f32.gmra.mxu0 %v126
  %v190 = vpop.f32.mrf.mxu0
  %v191 = vadd.f32 %v111, %v190
  %192 = vdwg.mxu0
  %v193 = vmul.f32 %v153, 0.01
  %v194 = vmul.f32 %v182, 0.01
  %v195 = vmul.f32 %v156, 0.01
  %v196 = vmul.f32 %v185, 0.01
  %v197 = vmul.f32 %v159, 0.01
  %v198 = vmul.f32 %v188, 0.01
  %v199 = vmul.f32 %v162, 0.01
  %v200 = vmul.f32 %v191, 0.01
  %v201 = vmax.f32 %v153, %v193
  %v202 = vmax.f32 %v182, %v194
  %v203 = vmax.f32 %v156, %v195
  %v204 = vmax.f32 %v185, %v196
  %v205 = vmax.f32 %v159, %v197
  %v206 = vmax.f32 %v188, %v198
  %v207 = vmax.f32 %v162, %v199
  %v208 = vmax.f32 %v191, %v200
  %v209 = vld [vmem:[%s4] sm:$0xff]
  %v210 = vld [vmem:[%s4 + $0x8] sm:$0xff]
  %v211 = vld [vmem:[%s4 + $0x10] sm:$0xff]
  %v212 = vld [vmem:[%s4 + $0x18] sm:$0xff]
  %v213 = vld [vmem:[%s4 + $0x20] sm:$0xff]
  %v214 = vld [vmem:[%s4 + $0x28] sm:$0xff]
  %v215 = vld [vmem:[%s4 + $0x30] sm:$0xff]
  %v216 = vld [vmem:[%s4 + $0x38] sm:$0xff]
  %v217 = vld [vmem:[%s4 + $0x40] sm:$0xff]
  %v218 = vld [vmem:[%s4 + $0x48] sm:$0xff]
  %v219 = vld [vmem:[%s4 + $0x50] sm:$0xff]
  %v220 = vld [vmem:[%s4 + $0x58] sm:$0xff]
  %v221 = vld [vmem:[%s4 + $0x60] sm:$0xff]
  %v222 = vld [vmem:[%s4 + $0x68] sm:$0xff]
  %v223 = vld [vmem:[%s4 + $0x70] sm:$0xff]
  %v224 = vld [vmem:[%s4 + $0x78] sm:$0xff]
  %v225 = vld [vmem:[%s4 + $0x80] sm:$0xff]
  %v226 = vld [vmem:[%s4 + $0x88] sm:$0xff]
  %v227 = vld [vmem:[%s4 + $0x90] sm:$0xff]
  %v228 = vld [vmem:[%s4 + $0x98] sm:$0xff]
  %v229 = vld [vmem:[%s4 + $0xa0] sm:$0xff]
  %v230 = vld [vmem:[%s4 + $0xa8] sm:$0xff]
  %v231 = vld [vmem:[%s4 + $0xb0] sm:$0xff]
  %v232 = vld [vmem:[%s4 + $0xb8] sm:$0xff]
  %v233 = vld [vmem:[%s4 + $0xc0] sm:$0xff]
  %v234 = vld [vmem:[%s4 + $0xc8] sm:$0xff]
  %v235 = vld [vmem:[%s4 + $0xd0] sm:$0xff]
  %v236 = vld [vmem:[%s4 + $0xd8] sm:$0xff]
  %v237 = vld [vmem:[%s4 + $0xe0] sm:$0xff]
  %v238 = vld [vmem:[%s4 + $0xe8] sm:$0xff]
  %v239 = vld [vmem:[%s4 + $0xf0] sm:$0xff]
  %v240 = vld [vmem:[%s4 + $0xf8] sm:$0xff]
  %v241 = vld [vmem:[%s4 + $0x100] sm:$0xff]
  %v242 = vld [vmem:[%s4 + $0x108] sm:$0xff]
  %v243 = vld [vmem:[%s4 + $0x110] sm:$0xff]
  %v244 = vld [vmem:[%s4 + $0x118] sm:$0xff]
  %v245 = vld [vmem:[%s4 + $0x120] sm:$0xff]
  %v246 = vld [vmem:[%s4 + $0x128] sm:$0xff]
  %v247 = vld [vmem:[%s4 + $0x130] sm:$0xff]
  %v248 = vld [vmem:[%s4 + $0x138] sm:$0xff]
  %v249 = vld [vmem:[%s4 + $0x140] sm:$0xff]
  %v250 = vld [vmem:[%s4 + $0x148] sm:$0xff]
  %v251 = vld [vmem:[%s4 + $0x150] sm:$0xff]
  %v252 = vld [vmem:[%s4 + $0x158] sm:$0xff]
  %v253 = vld [vmem:[%s4 + $0x160] sm:$0xff]
  %v254 = vld [vmem:[%s4 + $0x168] sm:$0xff]
  %v255 = vld [vmem:[%s4 + $0x170] sm:$0xff]
  %v256 = vld [vmem:[%s4 + $0x178] sm:$0xff]
  %v257 = vld [vmem:[%s5] sm:$0x3]
  %v259 = vperm.slane %v257, 0
  %v260 = vperm.slane %v257, 1
  %vm263 = vcmask 523264
  %v265 = vsel %vm263, %v202, 0
  %v268 = vsel %vm263, %v204, 0
  %v271 = vsel %vm263, %v206, 0
  %v274 = vsel %vm263, %v208, 0
  %276 = vmatpush.msra.mxu0 %v239
  %277 = vmatpush.msra.mxu0 %v237
  %278 = vmatpush.msra.mxu0 %v235
  %279 = vmatpush.msra.mxu0 %v233
  %280 = vmatpush.msra.mxu0 %v231
  %281 = vmatpush.msra.mxu0 %v229
  %282 = vmatpush.msra.mxu0 %v227
  %283 = vmatpush.msra.mxu0 %v225
  %284 = vmatpush.msra.mxu0 %v223
  %285 = vmatpush.msra.mxu0 %v221
  %286 = vmatpush.msra.mxu0 %v219
  %287 = vmatpush.msra.mxu0 %v217
  %288 = vmatpush.msra.mxu0 %v215
  %289 = vmatpush.msra.mxu0 %v213
  %290 = vmatpush.msra.mxu0 %v211
  %291 = vmatpush.msra.mxu0 %v209
  %292 = vmatmul.f32.gmra.mxu0 %v201
  %v293 = vpop.f32.mrf.mxu0
  %v294 = vadd.f32 %v259, %v293
  %295 = vmatmul.f32.gmra.mxu0 %v203
  %v296 = vpop.f32.mrf.mxu0
  %v297 = vadd.f32 %v259, %v296
  %298 = vmatmul.f32.gmra.mxu0 %v205
  %v299 = vpop.f32.mrf.mxu0
  %v300 = vadd.f32 %v259, %v299
  %301 = vmatmul.f32.gmra.mxu0 %v207
  %v302 = vpop.f32.mrf.mxu0
  %v303 = vadd.f32 %v259, %v302
  %304 = vdwg.mxu0
  %305 = vmatpush.msra.mxu0 0.0
  %306 = vmatpush.msra.mxu0 0.0
  %307 = vmatpush.msra.mxu0 0.0
  %308 = vmatpush.msra.mxu0 0.0
  %309 = vmatpush.msra.mxu0 0.0
  %310 = vmatpush.msra.mxu0 0.0
  %311 = vmatpush.msra.mxu0 0.0
  %312 = vmatpush.msra.mxu0 0.0
  %313 = vmatpush.msra.mxu0 %v255
  %314 = vmatpush.msra.mxu0 %v253
  %315 = vmatpush.msra.mxu0 %v251
  %316 = vmatpush.msra.mxu0 %v249
  %317 = vmatpush.msra.mxu0 %v247
  %318 = vmatpush.msra.mxu0 %v245
  %319 = vmatpush.msra.mxu0 %v243
  %320 = vmatpush.msra.mxu0 %v241
  %321 = vmatmul.f32.gmra.mxu0 %v265
  %v322 = vpop.f32.mrf.mxu0
  %v323 = vadd.f32 %v294, %v322
  %324 = vmatmul.f32.gmra.mxu0 %v268
  %v325 = vpop.f32.mrf.mxu0
  %v326 = vadd.f32 %v297, %v325
  %327 = vmatmul.f32.gmra.mxu0 %v271
  %v328 = vpop.f32.mrf.mxu0
  %v329 = vadd.f32 %v300, %v328
  %330 = vmatmul.f32.gmra.mxu0 %v274
  %v331 = vpop.f32.mrf.mxu0
  %v332 = vadd.f32 %v303, %v331
  %333 = vdwg.mxu0
  %334 = vmatpush.msra.mxu0 %v240
  %335 = vmatpush.msra.mxu0 %v238
  %336 = vmatpush.msra.mxu0 %v236
  %337 = vmatpush.msra.mxu0 %v234
  %338 = vmatpush.msra.mxu0 %v232
  %339 = vmatpush.msra.mxu0 %v230
  %340 = vmatpush.msra.mxu0 %v228
  %341 = vmatpush.msra.mxu0 %v226
  %342 = vmatpush.msra.mxu0 %v224
  %343 = vmatpush.msra.mxu0 %v222
  %344 = vmatpush.msra.mxu0 %v220
  %345 = vmatpush.msra.mxu0 %v218
  %346 = vmatpush.msra.mxu0 %v216
  %347 = vmatpush.msra.mxu0 %v214
  %348 = vmatpush.msra.mxu0 %v212
  %349 = vmatpush.msra.mxu0 %v210
  %350 = vmatmul.f32.gmra.mxu0 %v201
  %v351 = vpop.f32.mrf.mxu0
  %v352 = vadd.f32 %v260, %v351
  %353 = vmatmul.f32.gmra.mxu0 %v203
  %v354 = vpop.f32.mrf.mxu0
  %v355 = vadd.f32 %v260, %v354
  %356 = vmatmul.f32.gmra.mxu0 %v205
  %v357 = vpop.f32.mrf.mxu0
  %v358 = vadd.f32 %v260, %v357
  %359 = vmatmul.f32.gmra.mxu0 %v207
  %v360 = vpop.f32.mrf.mxu0
  %v361 = vadd.f32 %v260, %v360
  %362 = vdwg.mxu0
  %363 = vmatpush.msra.mxu0 0.0
  %364 = vmatpush.msra.mxu0 0.0
  %365 = vmatpush.msra.mxu0 0.0
  %366 = vmatpush.msra.mxu0 0.0
  %367 = vmatpush.msra.mxu0 0.0
  %368 = vmatpush.msra.mxu0 0.0
  %369 = vmatpush.msra.mxu0 0.0
  %370 = vmatpush.msra.mxu0 0.0
  %371 = vmatpush.msra.mxu0 %v256
  %372 = vmatpush.msra.mxu0 %v254
  %373 = vmatpush.msra.mxu0 %v252
  %374 = vmatpush.msra.mxu0 %v250
  %375 = vmatpush.msra.mxu0 %v248
  %376 = vmatpush.msra.mxu0 %v246
  %377 = vmatpush.msra.mxu0 %v244
  %378 = vmatpush.msra.mxu0 %v242
  %379 = vmatmul.f32.gmra.mxu0 %v265
  %v380 = vpop.f32.mrf.mxu0
  %v381 = vadd.f32 %v352, %v380
  %382 = vmatmul.f32.gmra.mxu0 %v268
  %v383 = vpop.f32.mrf.mxu0
  %v384 = vadd.f32 %v355, %v383
  %385 = vmatmul.f32.gmra.mxu0 %v271
  %v386 = vpop.f32.mrf.mxu0
  %v387 = vadd.f32 %v358, %v386
  %388 = vmatmul.f32.gmra.mxu0 %v274
  %v389 = vpop.f32.mrf.mxu0
  %v390 = vadd.f32 %v361, %v389
  %391 = vdwg.mxu0
  %v392 = vmul.f32 %v323, 0.01
  %v393 = vmul.f32 %v381, 0.01
  %v394 = vmul.f32 %v326, 0.01
  %v395 = vmul.f32 %v384, 0.01
  %v396 = vmul.f32 %v329, 0.01
  %v397 = vmul.f32 %v387, 0.01
  %v398 = vmul.f32 %v332, 0.01
  %v399 = vmul.f32 %v390, 0.01
  %v400 = vmax.f32 %v323, %v392
  %v401 = vmax.f32 %v381, %v393
  %v402 = vmax.f32 %v326, %v394
  %v403 = vmax.f32 %v384, %v395
  %v404 = vmax.f32 %v329, %v396
  %v405 = vmax.f32 %v387, %v397
  %v406 = vmax.f32 %v332, %v398
  %v407 = vmax.f32 %v390, %v399
  %v408 = vadd.f32 %v400, %v402
  %v409 = vadd.f32 %v408, %v404
  %v410 = vadd.f32 %v409, %v406
  %v411 = vadd.f32 %v401, %v403
  %v412 = vadd.f32 %v411, %v405
  %v413 = vadd.f32 %v412, %v407
  %v414 = vld [vmem:[%s6] sm:$0xff]
  %v415 = vld [vmem:[%s6 + $0x8] sm:$0xff]
  %v416 = vld [vmem:[%s6 + $0x10] sm:$0xff]
  %v417 = vld [vmem:[%s6 + $0x18] sm:$0xff]
  %v418 = vld [vmem:[%s6 + $0x20] sm:$0xff]
  %v419 = vld [vmem:[%s6 + $0x28] sm:$0xff]
  %v420 = vld [vmem:[%s6 + $0x30] sm:$0xff]
  %v421 = vld [vmem:[%s6 + $0x38] sm:$0xff]
  %v422 = vld [vmem:[%s6 + $0x40] sm:$0xff]
  %v423 = vld [vmem:[%s6 + $0x48] sm:$0xff]
  %v424 = vld [vmem:[%s6 + $0x50] sm:$0xff]
  %v425 = vld [vmem:[%s6 + $0x58] sm:$0xff]
  %v426 = vld [vmem:[%s6 + $0x60] sm:$0xff]
  %v427 = vld [vmem:[%s6 + $0x68] sm:$0xff]
  %v428 = vld [vmem:[%s6 + $0x70] sm:$0xff]
  %v429 = vld [vmem:[%s6 + $0x78] sm:$0xff]
  %v430 = vld [vmem:[%s6 + $0x80] sm:$0xff]
  %v431 = vld [vmem:[%s6 + $0x88] sm:$0xff]
  %v432 = vld [vmem:[%s6 + $0x90] sm:$0xff]
  %v433 = vld [vmem:[%s6 + $0x98] sm:$0xff]
  %v434 = vld [vmem:[%s6 + $0xa0] sm:$0xff]
  %v435 = vld [vmem:[%s6 + $0xa8] sm:$0xff]
  %v436 = vld [vmem:[%s6 + $0xb0] sm:$0xff]
  %v437 = vld [vmem:[%s6 + $0xb8] sm:$0xff]
  %v438 = vld [vmem:[%s6 + $0xc0] sm:$0xff]
  %v439 = vld [vmem:[%s6 + $0xc8] sm:$0xff]
  %v440 = vld [vmem:[%s6 + $0xd0] sm:$0xff]
  %v441 = vld [vmem:[%s6 + $0xd8] sm:$0xff]
  %v442 = vld [vmem:[%s6 + $0xe0] sm:$0xff]
  %v443 = vld [vmem:[%s6 + $0xe8] sm:$0xff]
  %v444 = vld [vmem:[%s6 + $0xf0] sm:$0xff]
  %v445 = vld [vmem:[%s6 + $0xf8] sm:$0xff]
  %v446 = vld [vmem:[%s6 + $0x100] sm:$0xff]
  %v447 = vld [vmem:[%s6 + $0x108] sm:$0xff]
  %v448 = vld [vmem:[%s6 + $0x110] sm:$0xff]
  %v449 = vld [vmem:[%s6 + $0x118] sm:$0xff]
  %v450 = vld [vmem:[%s6 + $0x120] sm:$0xff]
  %v451 = vld [vmem:[%s6 + $0x128] sm:$0xff]
  %v452 = vld [vmem:[%s6 + $0x130] sm:$0xff]
  %v453 = vld [vmem:[%s6 + $0x138] sm:$0xff]
  %v454 = vld [vmem:[%s6 + $0x140] sm:$0xff]
  %v455 = vld [vmem:[%s6 + $0x148] sm:$0xff]
  %v456 = vld [vmem:[%s6 + $0x150] sm:$0xff]
  %v457 = vld [vmem:[%s6 + $0x158] sm:$0xff]
  %v458 = vld [vmem:[%s6 + $0x160] sm:$0xff]
  %v459 = vld [vmem:[%s6 + $0x168] sm:$0xff]
  %v460 = vld [vmem:[%s6 + $0x170] sm:$0xff]
  %v461 = vld [vmem:[%s6 + $0x178] sm:$0xff]
  %v462 = vld [vmem:[%s6 + $0x180] sm:$0xff]
  %v463 = vld [vmem:[%s6 + $0x188] sm:$0xff]
  %v464 = vld [vmem:[%s6 + $0x190] sm:$0xff]
  %v465 = vld [vmem:[%s6 + $0x198] sm:$0xff]
  %v466 = vld [vmem:[%s6 + $0x1a0] sm:$0xff]
  %v467 = vld [vmem:[%s6 + $0x1a8] sm:$0xff]
  %v468 = vld [vmem:[%s6 + $0x1b0] sm:$0xff]
  %v469 = vld [vmem:[%s6 + $0x1b8] sm:$0xff]
  %v470 = vld [vmem:[%s6 + $0x1c0] sm:$0xff]
  %v471 = vld [vmem:[%s6 + $0x1c8] sm:$0xff]
  %v472 = vld [vmem:[%s6 + $0x1d0] sm:$0xff]
  %v473 = vld [vmem:[%s6 + $0x1d8] sm:$0xff]
  %v474 = vld [vmem:[%s6 + $0x1e0] sm:$0xff]
  %v475 = vld [vmem:[%s6 + $0x1e8] sm:$0xff]
  %v476 = vld [vmem:[%s6 + $0x1f0] sm:$0xff]
  %v477 = vld [vmem:[%s6 + $0x1f8] sm:$0xff]
  %v478 = vld [vmem:[%s6 + $0x200] sm:$0xff]
  %v479 = vld [vmem:[%s6 + $0x208] sm:$0xff]
  %v480 = vld [vmem:[%s6 + $0x210] sm:$0xff]
  %v481 = vld [vmem:[%s6 + $0x218] sm:$0xff]
  %v482 = vld [vmem:[%s6 + $0x220] sm:$0xff]
  %v483 = vld [vmem:[%s6 + $0x228] sm:$0xff]
  %v484 = vld [vmem:[%s6 + $0x230] sm:$0xff]
  %v485 = vld [vmem:[%s6 + $0x238] sm:$0xff]
  %v486 = vld [vmem:[%s6 + $0x240] sm:$0xff]
  %v487 = vld [vmem:[%s6 + $0x248] sm:$0xff]
  %v488 = vld [vmem:[%s6 + $0x250] sm:$0xff]
  %v489 = vld [vmem:[%s6 + $0x258] sm:$0xff]
  %v490 = vld [vmem:[%s6 + $0x260] sm:$0xff]
  %v491 = vld [vmem:[%s6 + $0x268] sm:$0xff]
  %v492 = vld [vmem:[%s6 + $0x270] sm:$0xff]
  %v493 = vld [vmem:[%s6 + $0x278] sm:$0xff]
  %v494 = vld [vmem:[%s6 + $0x280] sm:$0xff]
  %v495 = vld [vmem:[%s6 + $0x288] sm:$0xff]
  %v496 = vld [vmem:[%s6 + $0x290] sm:$0xff]
  %v497 = vld [vmem:[%s6 + $0x298] sm:$0xff]
  %v498 = vld [vmem:[%s6 + $0x2a0] sm:$0xff]
  %v499 = vld [vmem:[%s6 + $0x2a8] sm:$0xff]
  %v500 = vld [vmem:[%s6 + $0x2b0] sm:$0xff]
  %v501 = vld [vmem:[%s6 + $0x2b8] sm:$0xff]
  %v502 = vld [vmem:[%s6 + $0x2c0] sm:$0xff]
  %v503 = vld [vmem:[%s6 + $0x2c8] sm:$0xff]
  %v504 = vld [vmem:[%s6 + $0x2d0] sm:$0xff]
  %v505 = vld [vmem:[%s6 + $0x2d8] sm:$0xff]
  %v506 = vld [vmem:[%s6 + $0x2e0] sm:$0xff]
  %v507 = vld [vmem:[%s6 + $0x2e8] sm:$0xff]
  %v508 = vld [vmem:[%s6 + $0x2f0] sm:$0xff]
  %v509 = vld [vmem:[%s6 + $0x2f8] sm:$0xff]
  %v510 = vld [vmem:[%s7] sm:$0x7]
  %v512 = vperm.slane %v510, 0
  %v513 = vperm.slane %v510, 1
  %v514 = vperm.slane %v510, 2
  %518 = vmatpush.msra.mxu0 %v459
  %519 = vmatpush.msra.mxu0 %v456
  %520 = vmatpush.msra.mxu0 %v453
  %521 = vmatpush.msra.mxu0 %v450
  %522 = vmatpush.msra.mxu0 %v447
  %523 = vmatpush.msra.mxu0 %v444
  %524 = vmatpush.msra.mxu0 %v441
  %525 = vmatpush.msra.mxu0 %v438
  %526 = vmatpush.msra.mxu0 %v435
  %527 = vmatpush.msra.mxu0 %v432
  %528 = vmatpush.msra.mxu0 %v429
  %529 = vmatpush.msra.mxu0 %v426
  %530 = vmatpush.msra.mxu0 %v423
  %531 = vmatpush.msra.mxu0 %v420
  %532 = vmatpush.msra.mxu0 %v417
  %533 = vmatpush.msra.mxu0 %v414
  %534 = vmatmul.f32.gmra.mxu0 %v410
  %v535 = vpop.f32.mrf.mxu0
  %v536 = vadd.f32 %v512, %v535
  %537 = vdwg.mxu0
  %538 = vmatpush.msra.mxu0 %v507
  %539 = vmatpush.msra.mxu0 %v504
  %540 = vmatpush.msra.mxu0 %v501
  %541 = vmatpush.msra.mxu0 %v498
  %542 = vmatpush.msra.mxu0 %v495
  %543 = vmatpush.msra.mxu0 %v492
  %544 = vmatpush.msra.mxu0 %v489
  %545 = vmatpush.msra.mxu0 %v486
  %546 = vmatpush.msra.mxu0 %v483
  %547 = vmatpush.msra.mxu0 %v480
  %548 = vmatpush.msra.mxu0 %v477
  %549 = vmatpush.msra.mxu0 %v474
  %550 = vmatpush.msra.mxu0 %v471
  %551 = vmatpush.msra.mxu0 %v468
  %552 = vmatpush.msra.mxu0 %v465
  %553 = vmatpush.msra.mxu0 %v462
  %554 = vmatmul.f32.gmra.mxu0 %v413
  %v555 = vpop.f32.mrf.mxu0
  %v556 = vadd.f32 %v536, %v555
  %557 = vdwg.mxu0
  %558 = vmatpush.msra.mxu0 %v460
  %559 = vmatpush.msra.mxu0 %v457
  %560 = vmatpush.msra.mxu0 %v454
  %561 = vmatpush.msra.mxu0 %v451
  %562 = vmatpush.msra.mxu0 %v448
  %563 = vmatpush.msra.mxu0 %v445
  %564 = vmatpush.msra.mxu0 %v442
  %565 = vmatpush.msra.mxu0 %v439
  %566 = vmatpush.msra.mxu0 %v436
  %567 = vmatpush.msra.mxu0 %v433
  %568 = vmatpush.msra.mxu0 %v430
  %569 = vmatpush.msra.mxu0 %v427
  %570 = vmatpush.msra.mxu0 %v424
  %571 = vmatpush.msra.mxu0 %v421
  %572 = vmatpush.msra.mxu0 %v418
  %573 = vmatpush.msra.mxu0 %v415
  %574 = vmatmul.f32.gmra.mxu0 %v410
  %v575 = vpop.f32.mrf.mxu0
  %v576 = vadd.f32 %v513, %v575
  %577 = vdwg.mxu0
  %578 = vmatpush.msra.mxu0 %v508
  %579 = vmatpush.msra.mxu0 %v505
  %580 = vmatpush.msra.mxu0 %v502
  %581 = vmatpush.msra.mxu0 %v499
  %582 = vmatpush.msra.mxu0 %v496
  %583 = vmatpush.msra.mxu0 %v493
  %584 = vmatpush.msra.mxu0 %v490
  %585 = vmatpush.msra.mxu0 %v487
  %586 = vmatpush.msra.mxu0 %v484
  %587 = vmatpush.msra.mxu0 %v481
  %588 = vmatpush.msra.mxu0 %v478
  %589 = vmatpush.msra.mxu0 %v475
  %590 = vmatpush.msra.mxu0 %v472
  %591 = vmatpush.msra.mxu0 %v469
  %592 = vmatpush.msra.mxu0 %v466
  %593 = vmatpush.msra.mxu0 %v463
  %594 = vmatmul.f32.gmra.mxu0 %v413
  %v595 = vpop.f32.mrf.mxu0
  %v596 = vadd.f32 %v576, %v595
  %597 = vdwg.mxu0
  %598 = vmatpush.msra.mxu0 %v461
  %599 = vmatpush.msra.mxu0 %v458
  %600 = vmatpush.msra.mxu0 %v455
  %601 = vmatpush.msra.mxu0 %v452
  %602 = vmatpush.msra.mxu0 %v449
  %603 = vmatpush.msra.mxu0 %v446
  %604 = vmatpush.msra.mxu0 %v443
  %605 = vmatpush.msra.mxu0 %v440
  %606 = vmatpush.msra.mxu0 %v437
  %607 = vmatpush.msra.mxu0 %v434
  %608 = vmatpush.msra.mxu0 %v431
  %609 = vmatpush.msra.mxu0 %v428
  %610 = vmatpush.msra.mxu0 %v425
  %611 = vmatpush.msra.mxu0 %v422
  %612 = vmatpush.msra.mxu0 %v419
  %613 = vmatpush.msra.mxu0 %v416
  %614 = vmatmul.f32.gmra.mxu0 %v410
  %v615 = vpop.f32.mrf.mxu0
  %v616 = vadd.f32 %v514, %v615
  %617 = vdwg.mxu0
  %618 = vmatpush.msra.mxu0 %v509
  %619 = vmatpush.msra.mxu0 %v506
  %620 = vmatpush.msra.mxu0 %v503
  %621 = vmatpush.msra.mxu0 %v500
  %622 = vmatpush.msra.mxu0 %v497
  %623 = vmatpush.msra.mxu0 %v494
  %624 = vmatpush.msra.mxu0 %v491
  %625 = vmatpush.msra.mxu0 %v488
  %626 = vmatpush.msra.mxu0 %v485
  %627 = vmatpush.msra.mxu0 %v482
  %628 = vmatpush.msra.mxu0 %v479
  %629 = vmatpush.msra.mxu0 %v476
  %630 = vmatpush.msra.mxu0 %v473
  %631 = vmatpush.msra.mxu0 %v470
  %632 = vmatpush.msra.mxu0 %v467
  %633 = vmatpush.msra.mxu0 %v464
  %634 = vmatmul.f32.gmra.mxu0 %v413
  %v635 = vpop.f32.mrf.mxu0
  %v636 = vadd.f32 %v616, %v635
  %637 = vdwg.mxu0
  %v638 = vand.u32 2147483647, %v556
  %v639 = vand.u32 2147483647, %v596
  %v640 = vand.u32 2147483647, %v636
  %v641 = vsub.f32 0.0, %v638
  %v642 = vsub.f32 0.0, %v639
  %v643 = vsub.f32 0.0, %v640
  %v644 = vmul.f32 %v641, 1.442695
  %v645 = vpow.pop %v644
  %v646 = vmul.f32 %v642, 1.442695
  %v647 = vpow.pop %v646
  %v648 = vmul.f32 %v643, 1.442695
  %v649 = vpow.pop %v648
  %v650 = vadd.f32 %v645, 1.0
  %v651 = vadd.f32 %v647, 1.0
  %v652 = vadd.f32 %v649, 1.0
  %v653 = vrcp.pop %v650
  %v654 = vmul.f32 %v650, %v653
  %v655 = vsub.f32 1.0, %v654
  %v656 = vmul.f32 %v653, %v655
  %v657 = vadd.f32 %v653, %v656
  %vm658 = vweird.f32 %v650
  %vm659 = vweird.f32 %v653
  %vm660 = vmor %vm658, %vm659
  %v661 = vsel %vm660, %v653, %v657
  %v662 = vand.u32 2147483647, %v650
  %vm663 = vcmp.eq.f32.partialorder %v662, 8.507059e+37
  %v664 = vand.u32 %v650, 2147483648
  %v665 = vor.u32 1.1754944e-38, %v664
  %v666 = vsel %vm663, %v665, %v661
  %v667 = vmul.f32 1.0, %v666
  %v668 = vrcp.pop %v651
  %v669 = vmul.f32 %v651, %v668
  %v670 = vsub.f32 1.0, %v669
  %v671 = vmul.f32 %v668, %v670
  %v672 = vadd.f32 %v668, %v671
  %vm673 = vweird.f32 %v651
  %vm674 = vweird.f32 %v668
  %vm675 = vmor %vm673, %vm674
  %v676 = vsel %vm675, %v668, %v672
  %v677 = vand.u32 2147483647, %v651
  %vm678 = vcmp.eq.f32.partialorder %v677, 8.507059e+37
  %v679 = vand.u32 %v651, 2147483648
  %v680 = vor.u32 1.1754944e-38, %v679
  %v681 = vsel %vm678, %v680, %v676
  %v682 = vmul.f32 1.0, %v681
  %v683 = vrcp.pop %v652
  %v684 = vmul.f32 %v652, %v683
  %v685 = vsub.f32 1.0, %v684
  %v686 = vmul.f32 %v683, %v685
  %v687 = vadd.f32 %v683, %v686
  %vm688 = vweird.f32 %v652
  %vm689 = vweird.f32 %v683
  %vm690 = vmor %vm688, %vm689
  %v691 = vsel %vm690, %v683, %v687
  %v692 = vand.u32 2147483647, %v652
  %vm693 = vcmp.eq.f32.partialorder %v692, 8.507059e+37
  %v694 = vand.u32 %v652, 2147483648
  %v695 = vor.u32 1.1754944e-38, %v694
  %v696 = vsel %vm693, %v695, %v691
  %v697 = vmul.f32 1.0, %v696
  %vm698 = vcmp.ge.f32.partialorder %v556, 0.0
  %vm699 = vcmp.ge.f32.partialorder %v596, 0.0
  %vm700 = vcmp.ge.f32.partialorder %v636, 0.0
  %v701 = vsub.f32 1.0, %v667
  %v702 = vsub.f32 1.0, %v682
  %v703 = vsub.f32 1.0, %v697
  %v704 = vsel %vm698, %v667, %v701
  %v705 = vsel %vm699, %v682, %v702
  %v706 = vsel %vm700, %v697, %v703
  %707 = vst [vmem:[%s8] sm:$0xff] %v704
  %708 = vst [vmem:[%s8 + $0x8] sm:$0xff] %v705
  %vm709 = vcmask 113664
  %710 = vst.msk [vmem:[%s8 + $0x10] sm:$0xff] %vm709, %v706
  // Predicated region
  $region34: #{q_predictor_apply.1} parent=0 // pred_check
    _
  $region35: #{q_predictor_apply.1} parent=0 // pred_check_branch
    %712 = sbr.rel (0) target = $region37
  $region36: #{q_predictor_apply.1} parent=0 // pred_region
    _
  $region37: #{q_predictor_apply.1} parent=0 // pred_fallthru
    _
  // Predicated region
  $region38: #{q_predictor_apply.1} parent=0 // pred_check
    _
  $region39: #{q_predictor_apply.1} parent=0 // pred_check_branch
    %714 = sbr.rel (0) target = $region41
  $region40: #{q_predictor_apply.1} parent=0 // pred_region
    _
  $region41: #{q_predictor_apply.1} parent=0 // pred_fallthru
    _

</llo_original>
